<compile_context>
chip_gen: v7x
topology: tpu7x:2x2x1
jax: 0.10.0
libtpu: 0.0.40
codegen_flags: <defaults>
</compile_context>

<pallas_src>
import functools

import jax
import jax.numpy as jnp
import numpy as np
from jax import lax
from jax.experimental import pallas as pl
from jax.experimental.pallas import tpu as pltpu

_LANE = 128
_SUB = 8
_COS_EPS = 1e-8  # python float; passed statically so it is never a captured jax constant


def _two_tensorcores():
    """True only on chips with 2 TensorCores per chip (v7x)."""
    try:
        kind = jax.devices()[0].device_kind.lower()
    except Exception:
        return False
    return ("v7" in kind) or ("7x" in kind)


# ----------------------------- mse / mae kernel -----------------------------
def _mean_reduce_kernel(x_ref, y_ref, o_ref, *,
                        m_rows, block_rows, k_blocks, squared):
    c = pl.program_id(0)   # split axis (size 2 only on v7x; one per TensorCore)
    k = pl.program_id(1)   # sequential reduction axis

    @pl.when(k == 0)
    def _init():
        o_ref[...] = jnp.zeros_like(o_ref)

    # Global row offset of this (unclamped) block.
    row0 = (c * k_blocks + k) * block_rows

    def diff_val():
        d = x_ref[...].astype(jnp.float32) - y_ref[...].astype(jnp.float32)
        return (d * d) if squared else jnp.abs(d)

    def accum(v):
        # (block_rows, 128) -> (block_rows//8, 8, 128) -> (8, 128): vreg-aligned
        # adds; the resident output block is a single vreg regardless of N.
        o_ref[0] += v.reshape(block_rows // _SUB, _SUB, _LANE).sum(axis=0)

    # Interior blocks: unmasked fast path (no iota / compare / select).
    @pl.when(row0 + block_rows <= m_rows)
    def _fast():
        accum(diff_val())

    # Tail block (rows past the array contain garbage from the partial DMA)
    # and the duplicated clamped block the second split sees when nblocks is
    # odd: mask invalid rows to zero.
    @pl.when(row0 + block_rows > m_rows)
    def _masked():
        rows = lax.broadcasted_iota(jnp.int32, (block_rows, _LANE), 0) + row0
        accum(jnp.where(rows < m_rows, diff_val(), 0.0))


def _mean_reduce_loss(x, y, squared):
    assert x.shape == y.shape, "x and y must have the same shape"
    n = int(np.prod(x.shape))
    out_dtype = jnp.result_type(x.dtype, y.dtype)
    xf = x.reshape(-1)   # native dtype, no wrapper cast
    yf = y.reshape(-1)

    # Pad only when N is not a multiple of 8*128 (rare).  Padded entries are
    # zero in BOTH inputs so they contribute nothing to the sum.
    pad = (-n) % (_SUB * _LANE)
    if pad:
        xf = jnp.pad(xf, (0, pad))
        yf = jnp.pad(yf, (0, pad))
    m_rows = (n + pad) // _LANE                       # multiple of 8
    x2 = xf.reshape(m_rows, _LANE)
    y2 = yf.reshape(m_rows, _LANE)

    block_rows = min(4096, m_rows)                    # ~2 MiB f32 / input / buffer
    nblocks = -(-m_rows // block_rows)
    # Split the reduction across TensorCores only where there are two (v7x).
    n_split = 2 if (_two_tensorcores() and nblocks >= 2) else 1
    k_blocks = -(-nblocks // n_split)

    def in_map(c, k):
        # Clamp so the DMA never indexes past the array; the in-kernel row mask
        # zeroes the duplicated block's contribution.
        return (jnp.minimum(c * k_blocks + k, nblocks - 1), 0)

    kernel = functools.partial(
        _mean_reduce_kernel, m_rows=m_rows, block_rows=block_rows,
        k_blocks=k_blocks, squared=squared)

    partials = pl.pallas_call(
        kernel,
        out_shape=jax.ShapeDtypeStruct((n_split, _SUB, _LANE), jnp.float32),
        grid_spec=pltpu.PrefetchScalarGridSpec(
            num_scalar_prefetch=0,
            grid=(n_split, k_blocks),
            in_specs=[
                pl.BlockSpec((block_rows, _LANE), in_map),
                pl.BlockSpec((block_rows, _LANE), in_map),
            ],
            # Emit the raw accumulator block; the wrapper finishes the sum.
            out_specs=pl.BlockSpec((1, _SUB, _LANE), lambda c, k: (c, 0, 0)),
        ),
        compiler_params=pltpu.CompilerParams(
            dimension_semantics=("parallel", "arbitrary"),
            vmem_limit_bytes=32 << 20),
    )(x2, y2)
    return (jnp.sum(partials) / n).astype(out_dtype)


# ------------------------------- cosine kernels -------------------------------
def _cosine_nchw_kernel(x_ref, y_ref, o_ref, *, eps):
    # (tile_b, C, tile_hw): C on sublanes, H*W on lanes, several batch elements
    # per grid step.  OOB lanes of a partial tail hw-block / OOB rows of a
    # partial tail batch-block compute garbage that stays in its own
    # (row, lane) and is discarded on the masked write-back -- do not "fix".
    x = x_ref[...].astype(jnp.float32)
    y = y_ref[...].astype(jnp.float32)
    dot = jnp.sum(x * y, axis=1, keepdims=True)             # (tile_b, 1, tile_hw)
    nx = jnp.sqrt(jnp.sum(x * x, axis=1, keepdims=True))
    ny = jnp.sqrt(jnp.sum(y * y, axis=1, keepdims=True))
    # PyTorch CosineSimilarity clamps each norm separately.
    denom = jnp.maximum(nx, eps) * jnp.maximum(ny, eps)
    o_ref[...] = (1.0 - dot / denom).astype(o_ref.dtype)    # lane-dense store


def _cosine_rows_kernel(x_ref, y_ref, o_ref, *, eps):
    # (tile_b, D): batch on sublanes, reduced dim D on lanes -> full lane use.
    x = x_ref[...].astype(jnp.float32)
    y = y_ref[...].astype(jnp.float32)
    dot = jnp.sum(x * y, axis=-1, keepdims=True)            # (tile_b, 1)
    nx = jnp.sqrt(jnp.sum(x * x, axis=-1, keepdims=True))
    ny = jnp.sqrt(jnp.sum(y * y, axis=-1, keepdims=True))
    denom = jnp.maximum(nx, eps) * jnp.maximum(ny, eps)
    # Output is only B floats total (vs a 2*B*D input stream); the narrow
    # sublane-major store is negligible and avoids an in-kernel transpose.
    o_ref[...] = (1.0 - dot / denom).astype(o_ref.dtype)


def _cosine_nchw_loss(x, y):
    b, c = x.shape[0], x.shape[1]
    spatial = x.shape[2:]
    hw = int(np.prod(spatial))
    out_dtype = jnp.result_type(x.dtype, y.dtype)

    # NCHW kept as-is (free reshape, no transpose): (B, C, H*W).
    x3 = x.reshape(b, c, hw)   # native dtype, cast happens inside the kernel
    y3 = y.reshape(b, c, hw)

    # Tile sizing from the in-kernel f32 working set (inputs are upcast).
    row_f32 = c * hw * 4
    col_f32 = c * 4
    target_hw = max(_LANE, ((512 * 1024) // col_f32) // _LANE * _LANE)
    if hw <= target_hw:
        tile_hw = hw            # full-dim block: always legal
        # Small per-element payload: pack several batch elements per grid step
        # to amortize the ~0.35 us per-step overhead.
        tile_bb = max(1, min(b, (1 << 20) // max(row_f32, 1))) if row_f32 < (256 << 10) else 1
    else:
        tile_hw = target_hw     # multiple of 128; partial last block handled by Pallas
        tile_bb = 1
    n_hw = -(-hw // tile_hw)
    n_bb = -(-b // tile_bb)

    kernel = functools.partial(_cosine_nchw_kernel, eps=float(_COS_EPS))
    out = pl.pallas_call(
        kernel,
        out_shape=jax.ShapeDtypeStruct((b, 1, hw), out_dtype),
        grid_spec=pltpu.PrefetchScalarGridSpec(
            num_scalar_prefetch=0,
            grid=(n_bb, n_hw),
            in_specs=[
                pl.BlockSpec((tile_bb, c, tile_hw), lambda i, t: (i, 0, t)),
                pl.BlockSpec((tile_bb, c, tile_hw), lambda i, t: (i, 0, t)),
            ],
            out_specs=pl.BlockSpec((tile_bb, 1, tile_hw), lambda i, t: (i, 0, t)),
        ),
        compiler_params=pltpu.CompilerParams(
            dimension_semantics=("parallel", "parallel"),
            vmem_limit_bytes=32 << 20),
    )(x3, y3)
    return out.reshape((b,) + spatial)


def _cosine_rows_loss(x, y):
    b, d = x.shape
    out_dtype = jnp.result_type(x.dtype, y.dtype)

    row_f32 = d * 4                                     # f32 working set per row
    if b * row_f32 <= (2 << 20):
        tile_b = b                                      # one block over the batch
    else:
        cand = max(_SUB, ((1 << 20) // row_f32) // _SUB * _SUB)
        tile_b = b if cand >= b else cand               # multiple of 8 (or full B)
    n_b = -(-b // tile_b)

    kernel = functools.partial(_cosine_rows_kernel, eps=float(_COS_EPS))
    out = pl.pallas_call(
        kernel,
        out_shape=jax.ShapeDtypeStruct((b, 1), out_dtype),
        grid_spec=pltpu.PrefetchScalarGridSpec(
            num_scalar_prefetch=0,
            grid=(n_b,),
            in_specs=[
                pl.BlockSpec((tile_b, d), lambda i: (i, 0)),
                pl.BlockSpec((tile_b, d), lambda i: (i, 0)),
            ],
            out_specs=pl.BlockSpec((tile_b, 1), lambda i: (i, 0)),
        ),
        compiler_params=pltpu.CompilerParams(
            dimension_semantics=("parallel",),
            vmem_limit_bytes=32 << 20),
    )(x, y)
    return out.reshape(b)


def _cosine_loss(x, y):
    assert x.shape == y.shape and x.ndim >= 2
    if x.ndim == 2:
        # (B, D) CLIP-direction usage: reduced dim on lanes.
        return _cosine_rows_loss(x, y)
    return _cosine_nchw_loss(x, y)


# ------------------------------- public wrapper ------------------------------
def direction_loss(x, y, loss_type="mse"):
    """Pallas equivalent of DirectionLoss(loss_type)(x, y)."""
    if loss_type == "mse":
        return _mean_reduce_loss(x, y, squared=True)
    if loss_type == "mae":
        return _mean_reduce_loss(x, y, squared=False)
    if loss_type == "cosine":
        return _cosine_loss(x, y)
    raise ValueError(f"unknown loss_type: {loss_type}")


# ------------------------------------ main ------------------------------------
if __name__ == "__main__":
    key = jax.random.PRNGKey(0)
    kx, ky, ka, kb = jax.random.split(key, 4)
    # NCHW inputs (feature-map usage).
    x = jax.random.normal(kx, (2, 4, 16, 16), dtype=jnp.float32)
    y = jax.random.normal(ky, (2, 4, 16, 16), dtype=jnp.float32)
    # 2-D (B, D) inputs (CLIP-direction usage).
    x2d = jax.random.normal(ka, (2, 32), dtype=jnp.float32)
    y2d = jax.random.normal(kb, (2, 32), dtype=jnp.float32)

    mse = jax.block_until_ready(direction_loss(x, y, "mse"))
    mae = jax.block_until_ready(direction_loss(x, y, "mae"))
    cos4 = jax.block_until_ready(direction_loss(x, y, "cosine"))
    cos2 = jax.block_until_ready(direction_loss(x2d, y2d, "cosine"))

    # Pure-JAX references (PyTorch semantics, including per-norm eps clamp).
    mse_ref = jnp.mean((x - y) ** 2)
    mae_ref = jnp.mean(jnp.abs(x - y))

    def cos_ref_fn(u, v):
        dot = jnp.sum(u * v, axis=1)
        nu = jnp.sqrt(jnp.sum(u * u, axis=1))
        nv = jnp.sqrt(jnp.sum(v * v, axis=1))
        return 1.0 - dot / (jnp.maximum(nu, _COS_EPS) * jnp.maximum(nv, _COS_EPS))

    assert jnp.allclose(mse, mse_ref, rtol=1e-5, atol=1e-6), (mse, mse_ref)
    assert jnp.allclose(mae, mae_ref, rtol=1e-5, atol=1e-6), (mae, mae_ref)
    assert cos4.shape == (2, 16, 16)
    assert jnp.allclose(cos4, cos_ref_fn(x, y), rtol=1e-5, atol=1e-6)
    assert cos2.shape == (2,)
    assert jnp.allclose(cos2, cos_ref_fn(x2d, y2d), rtol=1e-5, atol=1e-6)

    print("KERNEL_OK")
</pallas_src>

<mosaic_0001>
module attributes {stable_mosaic.version = 11 : i64} {
  func.func @_mean_reduce_kernel(%arg0: i32, %arg1: i32, %arg2: memref<16x128xf32, #tpu.memory_space<vmem>>, %arg3: memref<16x128xf32, #tpu.memory_space<vmem>>, %arg4: memref<1x8x128xf32, #tpu.memory_space<vmem>>) attributes {dimension_semantics = [#tpu.dimension_semantics<parallel>, #tpu.dimension_semantics<arbitrary>], iteration_bounds = array<i64: 1, 1>, scalar_prefetch = 0 : i64, scratch_operands = 0 : i64, tpu.core_type = #tpu.core_type<tc>, window_params = [{transform_indices = @transform_0, window_bounds = array<i64: 16, 128>}, {transform_indices = @transform_1, window_bounds = array<i64: 16, 128>}, {transform_indices = @transform_2, window_bounds = array<i64: 1, 8, 128>}]} {
    %c0_i32 = arith.constant 0 : i32
    %0 = arith.cmpi eq, %arg1, %c0_i32 : i32
    %1 = arith.extui %0 : i1 to i32
    %c0_i32_0 = arith.constant 0 : i32
    %2 = arith.cmpi ne, %1, %c0_i32_0 : i32
    scf.if %2 {
      %cst = arith.constant 0.000000e+00 : f32
      %14 = vector.broadcast %cst : f32 to vector<1x8x128xf32>
      %c0 = arith.constant 0 : index
      %c0_7 = arith.constant 0 : index
      %c0_8 = arith.constant 0 : index
      %15 = vector.load %arg4[%c0, %c0_7, %c0_8] : memref<1x8x128xf32, #tpu.memory_space<vmem>>, vector<1x8x128xf32>
      tpu.vector_store %arg4[%c0, %c0_7, %c0_8], %14 {strides = array<i32>} : memref<1x8x128xf32, #tpu.memory_space<vmem>>, vector<1x8x128xf32>,
    } else {
    }
    %c1_i32 = arith.constant 1 : i32
    %3 = arith.muli %arg0, %c1_i32 : i32
    %4 = arith.addi %3, %arg1 : i32
    %c16_i32 = arith.constant 16 : i32
    %5 = arith.muli %4, %c16_i32 : i32
    %c16_i32_1 = arith.constant 16 : i32
    %6 = arith.addi %5, %c16_i32_1 : i32
    %c16_i32_2 = arith.constant 16 : i32
    %7 = arith.cmpi sle, %6, %c16_i32_2 : i32
    %8 = arith.extui %7 : i1 to i32
    %c0_i32_3 = arith.constant 0 : i32
    %9 = arith.cmpi ne, %8, %c0_i32_3 : i32
    scf.if %9 {
      %c0 = arith.constant 0 : index
      %c0_7 = arith.constant 0 : index
      %14 = vector.load %arg2[%c0, %c0_7] : memref<16x128xf32, #tpu.memory_space<vmem>>, vector<16x128xf32>
      %c0_8 = arith.constant 0 : index
      %c0_9 = arith.constant 0 : index
      %15 = vector.load %arg3[%c0_8, %c0_9] : memref<16x128xf32, #tpu.memory_space<vmem>>, vector<16x128xf32>
      %16 = arith.subf %14, %15 : vector<16x128xf32>
      %17 = arith.mulf %16, %16 : vector<16x128xf32>
      %c0_10 = arith.constant 0 : index
      %c0_11 = arith.constant 0 : index
      %c0_12 = arith.constant 0 : index
      %18 = vector.load %arg4[%c0_10, %c0_11, %c0_12] : memref<1x8x128xf32, #tpu.memory_space<vmem>>, vector<1x8x128xf32>
      %19 = vector.shape_cast %18 : vector<1x8x128xf32> to vector<8x128xf32>
      %20 = vector.shape_cast %17 : vector<16x128xf32> to vector<2x8x128xf32>
      %cst = arith.constant dense<0.000000e+00> : vector<8x128xf32>
      %21 = vector.multi_reduction <add>, %20, %cst [0] : vector<2x8x128xf32> to vector<8x128xf32>
      %22 = arith.addf %19, %21 : vector<8x128xf32>
      %c0_13 = arith.constant 0 : index
      %c0_14 = arith.constant 0 : index
      %c0_15 = arith.constant 0 : index
      %23 = vector.load %arg4[%c0_13, %c0_14, %c0_15] : memref<1x8x128xf32, #tpu.memory_space<vmem>>, vector<1x8x128xf32>
      %24 = vector.shape_cast %23 : vector<1x8x128xf32> to vector<8x128xf32>
      %25 = vector.shape_cast %22 : vector<8x128xf32> to vector<1x8x128xf32>
      tpu.vector_store %arg4[%c0_13, %c0_14, %c0_15], %25 {strides = array<i32>} : memref<1x8x128xf32, #tpu.memory_space<vmem>>, vector<1x8x128xf32>,
    } else {
    }
    %c16_i32_4 = arith.constant 16 : i32
    %10 = arith.addi %5, %c16_i32_4 : i32
    %c16_i32_5 = arith.constant 16 : i32
    %11 = arith.cmpi sgt, %10, %c16_i32_5 : i32
    %12 = arith.extui %11 : i1 to i32
    %c0_i32_6 = arith.constant 0 : i32
    %13 = arith.cmpi ne, %12, %c0_i32_6 : i32
    scf.if %13 {
      %14 = tpu.iota {dimensions = array<i32: 0>} : vector<16x128xi32>
      %15 = vector.broadcast %5 : i32 to vector<16x128xi32>
      %16 = arith.addi %14, %15 : vector<16x128xi32>
      %c16_i32_7 = arith.constant 16 : i32
      %17 = vector.broadcast %c16_i32_7 : i32 to vector<16x128xi32>
      %18 = arith.cmpi slt, %16, %17 : vector<16x128xi32>
      %c0 = arith.constant 0 : index
      %c0_8 = arith.constant 0 : index
      %19 = vector.load %arg2[%c0, %c0_8] : memref<16x128xf32, #tpu.memory_space<vmem>>, vector<16x128xf32>
      %c0_9 = arith.constant 0 : index
      %c0_10 = arith.constant 0 : index
      %20 = vector.load %arg3[%c0_9, %c0_10] : memref<16x128xf32, #tpu.memory_space<vmem>>, vector<16x128xf32>
      %21 = arith.subf %19, %20 : vector<16x128xf32>
      %22 = arith.mulf %21, %21 : vector<16x128xf32>
      %cst = arith.constant 0.000000e+00 : f32
      %23 = vector.broadcast %cst : f32 to vector<16x128xf32>
      %24 = arith.select %18, %22, %23 : vector<16x128xi1>, vector<16x128xf32>
      %c0_11 = arith.constant 0 : index
      %c0_12 = arith.constant 0 : index
      %c0_13 = arith.constant 0 : index
      %25 = vector.load %arg4[%c0_11, %c0_12, %c0_13] : memref<1x8x128xf32, #tpu.memory_space<vmem>>, vector<1x8x128xf32>
      %26 = vector.shape_cast %25 : vector<1x8x128xf32> to vector<8x128xf32>
      %27 = vector.shape_cast %24 : vector<16x128xf32> to vector<2x8x128xf32>
      %cst_14 = arith.constant dense<0.000000e+00> : vector<8x128xf32>
      %28 = vector.multi_reduction <add>, %27, %cst_14 [0] : vector<2x8x128xf32> to vector<8x128xf32>
      %29 = arith.addf %26, %28 : vector<8x128xf32>
      %c0_15 = arith.constant 0 : index
      %c0_16 = arith.constant 0 : index
      %c0_17 = arith.constant 0 : index
      %30 = vector.load %arg4[%c0_15, %c0_16, %c0_17] : memref<1x8x128xf32, #tpu.memory_space<vmem>>, vector<1x8x128xf32>
      %31 = vector.shape_cast %30 : vector<1x8x128xf32> to vector<8x128xf32>
      %32 = vector.shape_cast %29 : vector<8x128xf32> to vector<1x8x128xf32>
      tpu.vector_store %arg4[%c0_15, %c0_16, %c0_17], %32 {strides = array<i32>} : memref<1x8x128xf32, #tpu.memory_space<vmem>>, vector<1x8x128xf32>,
    } else {
    }
    return
  }
  func.func @transform_0(%arg0: i32, %arg1: i32) -> (i32, i32) {
    %c1_i32 = arith.constant 1 : i32
    %0 = arith.muli %arg0, %c1_i32 : i32
    %1 = arith.addi %0, %arg1 : i32
    %c0_i32 = arith.constant 0 : i32
    %2 = arith.minsi %1, %c0_i32 : i32
    %c0_i32_0 = arith.constant 0 : i32
    %c0_i32_1 = arith.constant 0 : i32
    return %2, %c0_i32_0 : i32, i32
  }
  func.func @transform_1(%arg0: i32, %arg1: i32) -> (i32, i32) {
    %c1_i32 = arith.constant 1 : i32
    %0 = arith.muli %arg0, %c1_i32 : i32
    %1 = arith.addi %0, %arg1 : i32
    %c0_i32 = arith.constant 0 : i32
    %2 = arith.minsi %1, %c0_i32 : i32
    %c0_i32_0 = arith.constant 0 : i32
    %c0_i32_1 = arith.constant 0 : i32
    return %2, %c0_i32_0 : i32, i32
  }
  func.func @transform_2(%arg0: i32, %arg1: i32) -> (i32, i32, i32) {
    %c0_i32 = arith.constant 0 : i32
    %c0_i32_0 = arith.constant 0 : i32
    %c0_i32_1 = arith.constant 0 : i32
    return %arg0, %c0_i32, %c0_i32_0 : i32, i32, i32
  }
}

</mosaic_0001>

<llo_original>
// kernel: tpu_custom_call.1
$region0: #{tpu_custom_call.1}
  #allocation0 [shape = 'u32[]', space=smem, size = 0x4, offset = 0x4, fixed_abs, tag = 'smem constant byte address 0x4 - core index']
  #allocation1 [shape = 'u32[144,128]{1,0:T(1,128)}', space=vmem, size = 0x12000, scoped, tag = 'internal scratch']
  %s0 = inlined_call_operand.hbm [shape: f32[16,128], index: 0, kind: input, shape index: {}]
  %s1 = inlined_call_operand.hbm [shape: f32[16,128], index: 1, kind: input, shape index: {}]
  %s2 = inlined_call_operand.hbm [shape: f32[1,8,128], index: 2, kind: output, shape index: {}]
  %s3 = sld [smem:[#allocation0]]
  $region38: #{tpu_custom_call.1} parent=0
    _
  %s5 = ssub.s32 1, %s3
  %s6 = scalar_select 0, %s5, %s3
  $region1: #{tpu_custom_call.1} parent=0
    #allocation2 [shape = 'u8[8192]{0}', space=vmem, size = 0x2000, scoped, tag = 'input window, operand 0, single buffered']
    #allocation3 [shape = 's32[1]{0}', space=sflag, size = 0x4, scoped, tag = 'scoped memory for tpu_custom_call.1']
    #allocation4 [shape = 's32[1]{0}', space=sflag, size = 0x4, scoped, tag = 'scoped memory for tpu_custom_call.1']
    #allocation5 [shape = 'u8[8192]{0}', space=vmem, size = 0x2000, scoped, tag = 'input window, operand 1, single buffered']
    #allocation6 [shape = 's32[1]{0}', space=sflag, size = 0x4, scoped, tag = 'scoped memory for tpu_custom_call.1']
    #allocation7 [shape = 'u8[4096]{0}', space=vmem, size = 0x1000, scoped, tag = 'output window, operand 0, single buffered']
    %7 = vsyncpa [#allocation3], 0
    %8 = vsyncpa [#allocation6], 0
    %9 = vsyncpa [#allocation4], 0
    // Predicated region
    $region2: #{tpu_custom_call.1} parent=1 // pred_check
      _
    $region3: #{tpu_custom_call.1} parent=1 // pred_check_branch
      %11 = sbr.rel (0) target = $region5
    $region4: #{tpu_custom_call.1} parent=1 // pred_region
      %s12 = sadd.s32 0, 0
      %p13 = scmp.lt.s32.totalorder %s12, 0
      %s14 = scalar_select %p13, %s12, 0
      %s15 = smul.u32 2, %s14
      %s17 = ssub.s32 256, 256
      %18 = vsyncadd [#allocation3], %s17
      %s19 = smul.addr %s15, 128
      %s20 = scalar_lea.hbm %s0, %s19
      %s21 = sshll.u32 [#allocation2], 4
      %s22 = int_to_ptr.vmem [resolvable:$true] %s21
      %27 = dma.hbm_to_vmem [thread:$0]  %s20, 256, %s22, [#allocation3], 128, 128, 8
    $region5: #{tpu_custom_call.1} parent=1 // pred_fallthru
      _
    // Predicated region
    $region6: #{tpu_custom_call.1} parent=1 // pred_check
      _
    $region7: #{tpu_custom_call.1} parent=1 // pred_check_branch
      %29 = sbr.rel (0) target = $region9
    $region8: #{tpu_custom_call.1} parent=1 // pred_region
      %s30 = sadd.s32 0, 0
      %p31 = scmp.lt.s32.totalorder %s30, 0
      %s32 = scalar_select %p31, %s30, 0
      %s33 = smul.u32 2, %s32
      %s35 = ssub.s32 256, 256
      %36 = vsyncadd [#allocation6], %s35
      %s37 = smul.addr %s33, 128
      %s38 = scalar_lea.hbm %s1, %s37
      %s39 = sshll.u32 [#allocation5], 4
      %s40 = int_to_ptr.vmem [resolvable:$true] %s39
      %45 = dma.hbm_to_vmem [thread:$0]  %s38, 256, %s40, [#allocation6], 128, 128, 8
    $region9: #{tpu_custom_call.1} parent=1 // pred_fallthru
      _
    // Predicated region
    $region10: #{tpu_custom_call.1} parent=1 // pred_check
      _
    $region11: #{tpu_custom_call.1} parent=1 // pred_check_branch
      %47 = sbr.rel (0) target = $region13
    $region12: #{tpu_custom_call.1} parent=1 // pred_region
      %48 = dma.done [#allocation3], 256
    $region13: #{tpu_custom_call.1} parent=1 // pred_fallthru
      _
    // Predicated region
    $region14: #{tpu_custom_call.1} parent=1 // pred_check
      _
    $region15: #{tpu_custom_call.1} parent=1 // pred_check_branch
      %50 = sbr.rel (0) target = $region17
    $region16: #{tpu_custom_call.1} parent=1 // pred_region
      %51 = dma.done [#allocation6], 256
    $region17: #{tpu_custom_call.1} parent=1 // pred_fallthru
      _
    %s52 = sadd.s32 0, 0
    %p53 = scmp.lt.s32.totalorder %s52, 0
    %s54 = scalar_select %p53, %s52, 0
    %s55 = smul.u32 2, %s54
    %s56 = sadd.s32 0, 0
    %p57 = scmp.lt.s32.totalorder %s56, 0
    %s58 = scalar_select %p57, %s56, 0
    %s59 = smul.u32 2, %s58
    %p60 = scmp.eq.s32.totalorder 0, 0
    // Predicated region
    $region18: #{tpu_custom_call.1} parent=1 // pred_check
      %p61 = pneg %p60
    $region19: #{tpu_custom_call.1} parent=1 // pred_check_branch
      %63 = sbr.rel (%p61) target = $region21
    $region20: #{tpu_custom_call.1} parent=1 // pred_region
      %64 = vst [vmem:[#allocation7] sm:$0xff] 0.0
    $region21: #{tpu_custom_call.1} parent=1 // pred_fallthru
      _
    %s65 = sadd.s32 0, 0
    %s66 = smul.u32 %s65, 16
    %s67 = sadd.s32 %s66, 16
    %p68 = scmp.le.s32.totalorder %s67, 16
    // Predicated region
    $region22: #{tpu_custom_call.1} parent=1 // pred_check
      %p69 = pneg %p68
    $region23: #{tpu_custom_call.1} parent=1 // pred_check_branch
      %71 = sbr.rel (%p69) target = $region25
    $region24: #{tpu_custom_call.1} parent=1 // pred_region
      %v72 = vld [vmem:[#allocation2] sm:$0xff]
      %v73 = vld [vmem:[#allocation2 + $0x8] sm:$0xff]
      %v74 = vld [vmem:[#allocation5] sm:$0xff]
      %v75 = vld [vmem:[#allocation5 + $0x8] sm:$0xff]
      %v76 = vsub.f32 %v72, %v74
      %v77 = vsub.f32 %v73, %v75
      %v78 = vmul.f32 %v76, %v76
      %v79 = vmul.f32 %v77, %v77
      %v80 = vld [vmem:[#allocation7] sm:$0xff]
      %v81 = vadd.f32 %v78, %v79
      %v82 = vadd.f32 %v80, %v81
      %83 = vst [vmem:[#allocation7] sm:$0xff] %v82
    $region25: #{tpu_custom_call.1} parent=1 // pred_fallthru
      _
    %p84 = scmp.gt.s32.totalorder %s67, 16
    // Predicated region
    $region26: #{tpu_custom_call.1} parent=1 // pred_check
      %p85 = pneg %p84
    $region27: #{tpu_custom_call.1} parent=1 // pred_check_branch
      %87 = sbr.rel (%p85) target = $region29
    $region28: #{tpu_custom_call.1} parent=1 // pred_region
      %v88 = vlaneseq
      %v89 = vshrl.u32 %v88, 7
      %v90 = vadd.s32 %v89, 8
      %v91 = vstv %s66
      %v92 = vadd.s32 %v89, %v91
      %v93 = vadd.s32 %v90, %v91
      %vm94 = vcmp.lt.s32.totalorder %v92, 16
      %vm95 = vcmp.lt.s32.totalorder %v93, 16
      %v96 = vld [vmem:[#allocation2] sm:$0xff]
      %v97 = vld [vmem:[#allocation2 + $0x8] sm:$0xff]
      %v98 = vld [vmem:[#allocation5] sm:$0xff]
      %v99 = vld [vmem:[#allocation5 + $0x8] sm:$0xff]
      %v100 = vsub.f32 %v96, %v98
      %v101 = vsub.f32 %v97, %v99
      %v102 = vmul.f32 %v100, %v100
      %v103 = vmul.f32 %v101, %v101
      %v104 = vsel %vm94, %v102, 0.0
      %v105 = vsel %vm95, %v103, 0.0
      %v106 = vld [vmem:[#allocation7] sm:$0xff]
      %v107 = vadd.f32 %v104, %v105
      %v108 = vadd.f32 %v106, %v107
      %109 = vst [vmem:[#allocation7] sm:$0xff] %v108
    $region29: #{tpu_custom_call.1} parent=1 // pred_fallthru
      _
    // Predicated region
    $region30: #{tpu_custom_call.1} parent=1 // pred_check
      _
    $region31: #{tpu_custom_call.1} parent=1 // pred_check_branch
      %111 = sbr.rel (0) target = $region33
    $region32: #{tpu_custom_call.1} parent=1 // pred_region
      %s113 = ssub.s32 128, 128
      %114 = vsyncadd [#allocation4], %s113
      %s116 = sshll.u32 [#allocation7], 4
      %s117 = int_to_ptr.vmem [resolvable:$true] %s116
      %119 = dma.vmem_to_hbm [thread:$0]  %s117, 128, %s2, [#allocation4]
    $region33: #{tpu_custom_call.1} parent=1 // pred_fallthru
      _
    // Predicated region
    $region34: #{tpu_custom_call.1} parent=1 // pred_check
      _
    $region35: #{tpu_custom_call.1} parent=1 // pred_check_branch
      %121 = sbr.rel (0) target = $region37
    $region36: #{tpu_custom_call.1} parent=1 // pred_region
      %122 = dma.done [#allocation4], 128
    $region37: #{tpu_custom_call.1} parent=1 // pred_fallthru
      _
    %123 = vsyncpa [#allocation3], 1
    %124 = vsyncpa [#allocation6], 1
    %125 = vsyncpa [#allocation4], 1

</llo_original>
